<compile_context>
chip_gen: v7x
topology: tpu7x:2x2x1
jax: 0.10.0
libtpu: 0.0.40
codegen_flags: <defaults>
</compile_context>

<pallas_src>
import jax
import jax.numpy as jnp
from jax.experimental import pallas as pl
from jax.experimental.pallas import tpu as pltpu

LAYERS = (2, 50, 50, 50, 1)
LB = (-1.0, -1.0)
UB = (1.0, 1.0)

# ---------------------------------------------------------------------------
# Parameter-slab layout (all row offsets 8-aligned so every in-kernel slice
# starts on a sublane-tile boundary; lane 0 start for every vector).
# ---------------------------------------------------------------------------
_H = LAYERS[1]                       # hidden width (50)


def _ru(v, m):
    return -(-v // m) * m


_R_W1 = 0                            # (H, H)   hidden layer 1 weights
_R_W2 = _R_W1 + _ru(_H, 8)           # (H, H)   hidden layer 2 weights
_R_W0 = _R_W2 + _ru(_H, 8)           # (H, 2)   input layer weights (norm folded)
_R_B0 = _R_W0 + _ru(_H, 8)           # (H, 1)   input layer bias   (norm folded)
_R_B1 = _R_B0 + _ru(_H, 8)           # (H, 1)
_R_B2 = _R_B1 + _ru(_H, 8)           # (H, 1)
_R_W3 = _R_B2 + _ru(_H, 8)           # (H, 1)   output layer weights (as column)
_R_B3 = _R_W3 + _ru(_H, 8)           # (1, 1)   output layer bias
_SLAB_ROWS = _ru(_R_B3 + 1, 8)
_SLAB_COLS = _ru(_H, 8)


# ---------------------------------------------------------------------------
# Kernel
# ---------------------------------------------------------------------------
def _mlp_kernel(x_ref, p_ref, o_ref):
    H = _H
    x = x_ref[...]                                            # (2, tile_n)

    # Layer 0: K=2 is a degenerate MXU shape -> two broadcast FMAs on the VPU.
    # Normalization (x - lb)/(ub - lb) is already folded into w0/b0.
    w0 = p_ref[_R_W0:_R_W0 + H, 0:2]                          # (H, 2)
    b0 = p_ref[_R_B0:_R_B0 + H, 0:1]                          # (H, 1)
    h = jnp.tanh(w0[:, 0:1] * x[0:1, :] + w0[:, 1:2] * x[1:2, :] + b0)

    # Hidden layers on the MXU; activations stay lane-dense (H, tile_n).
    w1 = p_ref[_R_W1:_R_W1 + H, 0:H]
    b1 = p_ref[_R_B1:_R_B1 + H, 0:1]
    h = jnp.tanh(jnp.dot(w1, h, preferred_element_type=jnp.float32) + b1)

    w2 = p_ref[_R_W2:_R_W2 + H, 0:H]
    b2 = p_ref[_R_B2:_R_B2 + H, 0:1]
    h = jnp.tanh(jnp.dot(w2, h, preferred_element_type=jnp.float32) + b2)

    # Output layer (single unit): VPU multiply + sublane (XLU) reduction.
    w3t = p_ref[_R_W3:_R_W3 + H, 0:1]                         # (H, 1)
    b3 = p_ref[_R_B3:_R_B3 + 1, 0:1]                          # (1, 1)
    out = jnp.sum(h * w3t, axis=0, keepdims=True) + b3        # (1, tile_n)
    o_ref[...] = out.astype(o_ref.dtype)


# ---------------------------------------------------------------------------
# Parameters
# ---------------------------------------------------------------------------
def init_params(key, layers=LAYERS):
    """Xavier-normal weights (gain=1.0), zero biases, torch layout (out, in)."""
    params = []
    for i in range(len(layers) - 1):
        key, sub = jax.random.split(key)
        fan_in, fan_out = layers[i], layers[i + 1]
        std = (2.0 / (fan_in + fan_out)) ** 0.5
        w = std * jax.random.normal(sub, (fan_out, fan_in), dtype=jnp.float32)
        b = jnp.zeros((fan_out,), dtype=jnp.float32)
        params.append((w, b))
    return params


def pack_params(params, lb=LB, ub=UB):
    """Fold normalization into layer 0 and pack everything into one f32 slab."""
    (w0, b0), (w1, b1), (w2, b2), (w3, b3) = params
    lb = jnp.asarray(lb, jnp.float32)
    ub = jnp.asarray(ub, jnp.float32)
    scale = 1.0 / (ub - lb)                                   # (2,)
    w0p = (w0 * scale[None, :]).astype(jnp.float32)           # W0' = W0 * scale
    b0p = (b0 - w0 @ (lb * scale)).astype(jnp.float32)        # b0' = b0 - W0 @ (lb*scale)

    H = _H
    slab = jnp.zeros((_SLAB_ROWS, _SLAB_COLS), jnp.float32)
    slab = slab.at[_R_W1:_R_W1 + H, 0:H].set(w1)
    slab = slab.at[_R_W2:_R_W2 + H, 0:H].set(w2)
    slab = slab.at[_R_W0:_R_W0 + H, 0:2].set(w0p)
    slab = slab.at[_R_B0:_R_B0 + H, 0].set(b0p)
    slab = slab.at[_R_B1:_R_B1 + H, 0].set(b1)
    slab = slab.at[_R_B2:_R_B2 + H, 0].set(b2)
    slab = slab.at[_R_W3:_R_W3 + H, 0].set(w3[0, :])
    slab = slab.at[_R_B3, 0].set(b3[0])
    return slab


# ---------------------------------------------------------------------------
# Wrapper
# ---------------------------------------------------------------------------
def _choose_tile(n, max_tile=4096):
    """Pick a lane-aligned batch tile; keep the grid >= 2 steps when there is
    enough work so both v7x TensorCores are used (on single-TC v5e/v6e the
    extra step costs only ~0.35 us)."""
    n = max(int(n), 1)
    if n <= 256:
        return _ru(n, 128)
    steps = max(2, -(-n // max_tile))
    return _ru(-(-n // steps), 128)


@jax.jit
def sequentialmodel_forward_t(x_t, slab):
    """Primary entry point: feature-major input.

    x_t:  (2, N) raw (un-normalized) inputs.
    Returns (1, N) f32 — lane-dense, no host-side relayout needed.
    """
    f_in, n = x_t.shape
    assert f_in == LAYERS[0]
    x_t = x_t.astype(jnp.float32)

    tile_n = _choose_tile(n)
    n_pad = _ru(n, tile_n)
    if n_pad != n:
        x_t = jnp.pad(x_t, ((0, 0), (0, n_pad - n)))

    out = pl.pallas_call(
        _mlp_kernel,
        out_shape=jax.ShapeDtypeStruct((1, n_pad), jnp.float32),
        grid=(n_pad // tile_n,),
        in_specs=[
            pl.BlockSpec((f_in, tile_n), lambda i: (0, i)),
            # Single parameter slab, constant block index -> resident in VMEM
            # across the whole grid, one DMA at pipeline startup.
            pl.BlockSpec((_SLAB_ROWS, _SLAB_COLS), lambda i: (0, 0)),
        ],
        out_specs=pl.BlockSpec((1, tile_n), lambda i: (0, i)),
        compiler_params=pltpu.CompilerParams(
            dimension_semantics=("parallel",)),
    )(x_t, slab)

    return out[:, :n] if n_pad != n else out


def sequentialmodel_forward(x, slab):
    """Convenience entry point with torch layout: x (N, 2) -> (N, 1).

    Prefer `sequentialmodel_forward_t` upstream to avoid the per-call
    (N,2)->(2,N) transpose and (1,N)->(N,1) relayout outside the kernel.
    """
    return sequentialmodel_forward_t(x.T, slab).T


# ---------------------------------------------------------------------------
# Pure-JAX reference (matches the PyTorch module semantics exactly)
# ---------------------------------------------------------------------------
def _reference_forward(x, params):
    lb = jnp.asarray(LB, jnp.float32)
    ub = jnp.asarray(UB, jnp.float32)
    a = (x - lb) / (ub - lb)
    for i, (w, b) in enumerate(params):
        z = a @ w.T + b
        a = jnp.tanh(z) if i < len(params) - 1 else z
    return a


if __name__ == "__main__":
    key = jax.random.PRNGKey(0)
    key, xkey = jax.random.split(key)

    params = init_params(key)
    slab = pack_params(params)

    # Collocation-point batch in [-1, 1]^2 (like X_f_train).  1000 points is
    # deliberately NOT a tile multiple so the padding path is exercised;
    # the chosen tile (512) gives a 2-step parallel grid for v7x.
    n_points = 1000
    x = jax.random.uniform(xkey, (n_points, 2), dtype=jnp.float32,
                           minval=-1.0, maxval=1.0)

    out = sequentialmodel_forward(x, slab)
    out = jax.block_until_ready(out)

    ref = _reference_forward(x, params)
    assert out.shape == (n_points, 1)
    assert jnp.allclose(out, ref, atol=3e-5, rtol=1e-4), (
        "mismatch vs reference, max abs err = "
        f"{float(jnp.max(jnp.abs(out - ref)))}")

    print("KERNEL_OK")
</pallas_src>

<mosaic_0001>
module attributes {stable_mosaic.version = 11 : i64} {
  func.func @_mlp_kernel(%arg0: i32, %arg1: memref<2x512xf32, #tpu.memory_space<vmem>>, %arg2: memref<400x56xf32, #tpu.memory_space<vmem>>, %arg3: memref<1x512xf32, #tpu.memory_space<vmem>>) attributes {dimension_semantics = [#tpu.dimension_semantics<parallel>], iteration_bounds = array<i64: 2>, scalar_prefetch = 0 : i64, scratch_operands = 0 : i64, tpu.core_type = #tpu.core_type<tc>, window_params = [{transform_indices = @transform_0, window_bounds = array<i64: 2, 512>}, {pipeline_mode = #tpu.pipeline_mode<synchronous>, transform_indices = @transform_1, window_bounds = array<i64: 400, 56>}, {transform_indices = @transform_2, window_bounds = array<i64: 1, 512>}]} {
    %c0 = arith.constant 0 : index
    %c0_0 = arith.constant 0 : index
    %0 = vector.load %arg1[%c0, %c0_0] : memref<2x512xf32, #tpu.memory_space<vmem>>, vector<2x512xf32>
    %c112 = arith.constant 112 : index
    %c0_1 = arith.constant 0 : index
    %1 = vector.load %arg2[%c112, %c0_1] : memref<400x56xf32, #tpu.memory_space<vmem>>, vector<50x2xf32>
    %c168 = arith.constant 168 : index
    %c0_2 = arith.constant 0 : index
    %2 = vector.load %arg2[%c168, %c0_2] : memref<400x56xf32, #tpu.memory_space<vmem>>, vector<50x1xf32>
    %3 = vector.extract_strided_slice %1 {offsets = [0, 0], sizes = [50, 1], strides = [1, 1]} : vector<50x2xf32> to vector<50x1xf32>
    %4 = vector.extract_strided_slice %0 {offsets = [0, 0], sizes = [1, 512], strides = [1, 1]} : vector<2x512xf32> to vector<1x512xf32>
    %5 = vector.broadcast %3 : vector<50x1xf32> to vector<50x512xf32>
    %6 = vector.broadcast %4 : vector<1x512xf32> to vector<50x512xf32>
    %7 = arith.mulf %5, %6 : vector<50x512xf32>
    %8 = vector.extract_strided_slice %1 {offsets = [0, 1], sizes = [50, 1], strides = [1, 1]} : vector<50x2xf32> to vector<50x1xf32>
    %9 = vector.extract_strided_slice %0 {offsets = [1, 0], sizes = [1, 512], strides = [1, 1]} : vector<2x512xf32> to vector<1x512xf32>
    %10 = vector.broadcast %8 : vector<50x1xf32> to vector<50x512xf32>
    %11 = vector.broadcast %9 : vector<1x512xf32> to vector<50x512xf32>
    %12 = arith.mulf %10, %11 : vector<50x512xf32>
    %13 = arith.addf %7, %12 : vector<50x512xf32>
    %14 = vector.broadcast %2 : vector<50x1xf32> to vector<50x512xf32>
    %15 = arith.addf %13, %14 : vector<50x512xf32>
    %16 = math.tanh %15 : vector<50x512xf32>
    %c0_3 = arith.constant 0 : index
    %c0_4 = arith.constant 0 : index
    %17 = vector.load %arg2[%c0_3, %c0_4] : memref<400x56xf32, #tpu.memory_space<vmem>>, vector<50x50xf32>
    %c224 = arith.constant 224 : index
    %c0_5 = arith.constant 0 : index
    %18 = vector.load %arg2[%c224, %c0_5] : memref<400x56xf32, #tpu.memory_space<vmem>>, vector<50x1xf32>
    %cst = arith.constant dense<0.000000e+00> : vector<50x512xf32>
    %19 = tpu.matmul %17, %16, %cst {dimension_numbers = #tpu.dot_dimension_numbers<[1], [0], [0], [1], [0, 0, 1, 1], [], []>} : vector<50x50xf32>, vector<50x512xf32>, vector<50x512xf32> -> vector<50x512xf32>
    %20 = vector.broadcast %18 : vector<50x1xf32> to vector<50x512xf32>
    %21 = arith.addf %19, %20 : vector<50x512xf32>
    %22 = math.tanh %21 : vector<50x512xf32>
    %c56 = arith.constant 56 : index
    %c0_6 = arith.constant 0 : index
    %23 = vector.load %arg2[%c56, %c0_6] : memref<400x56xf32, #tpu.memory_space<vmem>>, vector<50x50xf32>
    %c280 = arith.constant 280 : index
    %c0_7 = arith.constant 0 : index
    %24 = vector.load %arg2[%c280, %c0_7] : memref<400x56xf32, #tpu.memory_space<vmem>>, vector<50x1xf32>
    %cst_8 = arith.constant dense<0.000000e+00> : vector<50x512xf32>
    %25 = tpu.matmul %23, %22, %cst_8 {dimension_numbers = #tpu.dot_dimension_numbers<[1], [0], [0], [1], [0, 0, 1, 1], [], []>} : vector<50x50xf32>, vector<50x512xf32>, vector<50x512xf32> -> vector<50x512xf32>
    %26 = vector.broadcast %24 : vector<50x1xf32> to vector<50x512xf32>
    %27 = arith.addf %25, %26 : vector<50x512xf32>
    %28 = math.tanh %27 : vector<50x512xf32>
    %c336 = arith.constant 336 : index
    %c0_9 = arith.constant 0 : index
    %29 = vector.load %arg2[%c336, %c0_9] : memref<400x56xf32, #tpu.memory_space<vmem>>, vector<50x1xf32>
    %c392 = arith.constant 392 : index
    %c0_10 = arith.constant 0 : index
    %30 = vector.load %arg2[%c392, %c0_10] : memref<400x56xf32, #tpu.memory_space<vmem>>, vector<1x1xf32>
    %31 = vector.broadcast %29 : vector<50x1xf32> to vector<50x512xf32>
    %32 = arith.mulf %28, %31 : vector<50x512xf32>
    %cst_11 = arith.constant dense<0.000000e+00> : vector<512xf32>
    %33 = vector.multi_reduction <add>, %32, %cst_11 [0] : vector<50x512xf32> to vector<512xf32>
    %34 = vector.shape_cast %33 : vector<512xf32> to vector<1x512xf32>
    %35 = vector.broadcast %30 : vector<1x1xf32> to vector<1x512xf32>
    %36 = arith.addf %34, %35 : vector<1x512xf32>
    %c0_12 = arith.constant 0 : index
    %c0_13 = arith.constant 0 : index
    %37 = vector.load %arg3[%c0_12, %c0_13] : memref<1x512xf32, #tpu.memory_space<vmem>>, vector<1x512xf32>
    tpu.vector_store %arg3[%c0_12, %c0_13], %36 {strides = array<i32>} : memref<1x512xf32, #tpu.memory_space<vmem>>, vector<1x512xf32>,
    return
  }
  func.func @transform_0(%arg0: i32) -> (i32, i32) {
    %c0_i32 = arith.constant 0 : i32
    %c0_i32_0 = arith.constant 0 : i32
    return %c0_i32, %arg0 : i32, i32
  }
  func.func @transform_1(%arg0: i32) -> (i32, i32) {
    %c0_i32 = arith.constant 0 : i32
    %c0_i32_0 = arith.constant 0 : i32
    %c0_i32_1 = arith.constant 0 : i32
    return %c0_i32, %c0_i32_0 : i32, i32
  }
  func.func @transform_2(%arg0: i32) -> (i32, i32) {
    %c0_i32 = arith.constant 0 : i32
    %c0_i32_0 = arith.constant 0 : i32
    return %c0_i32, %arg0 : i32, i32
  }
}

</mosaic_0001>

<llo_original>
// kernel: sequentialmodel_forward_t.1
$region0: #{sequentialmodel_forward_t.1}
  #allocation0 [shape = 'u32[]', space=smem, size = 0x4, offset = 0x4, fixed_abs, tag = 'smem constant byte address 0x4 - core index']
  #allocation1 [shape = 'u32[144,128]{1,0:T(1,128)}', space=vmem, size = 0x12000, scoped, tag = 'internal scratch']
  %s0 = inlined_call_operand.vmem [shape: f32[2,1024], index: 0, kind: input, shape index: {}]
  %s1 = inlined_call_operand.vmem [shape: f32[400,56], index: 1, kind: input, shape index: {}]
  %s2 = inlined_call_operand.hbm [shape: f32[1,1024], index: 2, kind: output, shape index: {}]
  %s3 = sld [smem:[#allocation0]]
  $region41: #{sequentialmodel_forward_t.1} parent=0
    _
  %s5 = ssub.s32 1, %s3
  %s6 = scalar_select 0, %s5, %s3
  $region1: #{sequentialmodel_forward_t.1} parent=0
    #allocation2 [shape = 'u8[4096]{0}', space=vmem, size = 0x1000, scoped, tag = 'output window, operand 0']
    #allocation3 [shape = 's32[2]{0}', space=sflag, size = 0x8, scoped, tag = 'scoped memory for sequentialmodel_forward_t.1']
    %7 = vsyncpa [#allocation3], 0
    %s8 = scalar_lea.sflag [#allocation3], 1
    %9 = vsyncpa %s8, 0
    loop: start=0, step=1, limit=4
    $region2: #{sequentialmodel_forward_t.1} parent=1 // loop_pre_header
      _
    $region3: #{sequentialmodel_forward_t.1} parent=1 // loop_header
      %s11 = sphi 0, %s15
      %p12 = scmp.ge.s32.totalorder %s11, 4
      %s21 = sphi 0, %s23
      %s24 = sphi 0, %s21
      %s25 = sphi 0, %s24
      %s41 = sphi 0, %s25
      %s45 = sphi 0, %s45
      %s47 = sphi 0, %s45
      %s48 = sphi 0, %s47
      %s62 = sphi 0, %s48
      %s68 = sphi 0, %s70
      %s71 = sphi 0, %s68
      %s72 = sphi 0, %s71
      %s88 = sphi 0, %s72
    $region4: #{sequentialmodel_forward_t.1} parent=1 // loop_header_branch
      %14 = sbr.rel (%p12) target = $region8
    $region5: #{sequentialmodel_forward_t.1} parent=1 // loop_body
      %s16 = ssub.s32 %s11, 1
      %s17 = ssub.s32 %s11, 2
      %s18 = sadd.s32 %s11, 1
      %s19 = ssub.s32 %s11, %s18
      %p20 = scmp.eq.s32.totalorder %s19, 0
      %s22 = sadd.s32 %s21, 1
      %s23 = scalar_select %p20, %s21, %s22
      %p26 = pneg %p20
      %p27 = scmp.eq.s32.totalorder %s11, 1
      %p28 = por %p26, %p27
      %p29 = scmp.ne.s32.totalorder %s21, %s24
      %p30 = scmp.eq.s32.totalorder %s11, 0
      %p31 = por %p29, %p30
      %p32 = scmp.ne.s32.totalorder %s21, %s24
      %p33 = scmp.eq.s32.totalorder %s16, 1
      %p34 = por %p32, %p33
      %p35 = scmp.ne.s32.totalorder %s24, %s25
      %p36 = scmp.eq.s32.totalorder %s16, 0
      %p37 = por %p35, %p36
      %p38 = scmp.ne.s32.totalorder %s24, %s25
      %p39 = scmp.eq.s32.totalorder %s17, 1
      %p40 = por %p38, %p39
      %p42 = scmp.ne.s32.totalorder %s25, %s41
      %p43 = scmp.eq.s32.totalorder %s17, 0
      %p44 = por %p42, %p43
      %s46 = sadd.s32 %s45, 1
      %p49 = scmp.eq.s32.totalorder %s11, 1
      %p50 = scmp.ne.s32.totalorder %s45, %s47
      %p51 = scmp.eq.s32.totalorder %s11, 0
      %p52 = por %p50, %p51
      %p53 = scmp.ne.s32.totalorder %s45, %s47
      %p54 = scmp.eq.s32.totalorder %s16, 1
      %p55 = por %p53, %p54
      %p56 = scmp.ne.s32.totalorder %s47, %s48
      %p57 = scmp.eq.s32.totalorder %s16, 0
      %p58 = por %p56, %p57
      %p59 = scmp.ne.s32.totalorder %s47, %s48
      %p60 = scmp.eq.s32.totalorder %s17, 1
      %p61 = por %p59, %p60
      %p63 = scmp.ne.s32.totalorder %s48, %s62
      %p64 = scmp.eq.s32.totalorder %s17, 0
      %p65 = por %p63, %p64
      %s66 = ssub.s32 %s11, %s18
      %p67 = scmp.eq.s32.totalorder %s66, 0
      %s69 = sadd.s32 %s68, 1
      %s70 = scalar_select %p67, %s68, %s69
      %p73 = pneg %p67
      %p74 = scmp.eq.s32.totalorder %s11, 1
      %p75 = por %p73, %p74
      %p76 = scmp.ne.s32.totalorder %s68, %s71
      %p77 = scmp.eq.s32.totalorder %s11, 0
      %p78 = por %p76, %p77
      %p79 = scmp.ne.s32.totalorder %s68, %s71
      %p80 = scmp.eq.s32.totalorder %s16, 1
      %p81 = por %p79, %p80
      %p82 = scmp.ne.s32.totalorder %s71, %s72
      %p83 = scmp.eq.s32.totalorder %s16, 0
      %p84 = por %p82, %p83
      %p85 = scmp.ne.s32.totalorder %s71, %s72
      %p86 = scmp.eq.s32.totalorder %s17, 1
      %p87 = por %p85, %p86
      %p89 = scmp.ne.s32.totalorder %s72, %s88
      %p90 = scmp.eq.s32.totalorder %s17, 0
      %p91 = por %p89, %p90
      %p92 = scmp.le.s32.totalorder 1, %s11
      %p93 = scmp.lt.s32.totalorder %s11, 3
      %p94 = pnand %p92, %p93
      %p95 = pneg %p94
      // Predicated region
      $region9: #{sequentialmodel_forward_t.1} parent=5 // pred_check
        _
      $region10: #{sequentialmodel_forward_t.1} parent=5 // pred_check_branch
        %97 = sbr.rel (%p94) target = $region12
      $region11: #{sequentialmodel_forward_t.1} parent=5 // pred_region
        %s98 = ssub.s32 %s11, 1
        // Predicated region
        $region13: #{sequentialmodel_forward_t.1} parent=11 // pred_check
          %p99 = pneg %p58
        $region14: #{sequentialmodel_forward_t.1} parent=11 // pred_check_branch
          %101 = sbr.rel (%p99) target = $region16
        $region15: #{sequentialmodel_forward_t.1} parent=11 // pred_region
          _
        $region16: #{sequentialmodel_forward_t.1} parent=11 // pred_fallthru
          _
      $region12: #{sequentialmodel_forward_t.1} parent=5 // pred_fallthru
        _
      %p102 = scmp.lt.s32.totalorder %s11, 2
      // Predicated region
      $region17: #{sequentialmodel_forward_t.1} parent=5 // pred_check
        %p103 = pneg %p102
      $region18: #{sequentialmodel_forward_t.1} parent=5 // pred_check_branch
        %105 = sbr.rel (%p103) target = $region20
      $region19: #{sequentialmodel_forward_t.1} parent=5 // pred_region
        // Predicated region
        $region21: #{sequentialmodel_forward_t.1} parent=19 // pred_check
          %p106 = pneg %p31
        $region22: #{sequentialmodel_forward_t.1} parent=19 // pred_check_branch
          %108 = sbr.rel (%p106) target = $region24
        $region23: #{sequentialmodel_forward_t.1} parent=19 // pred_region
          %s109 = smul.u32 4, %s11
          %p110 = scmp.lt.s32.totalorder %s109, 7
          %s111 = scalar_select %p110, %s109, 7
          %s112 = smul.addr %s111, 2
          %s113 = scalar_lea.vmem %s0, %s112
          %s114 = smul.u32 4, %s11
        $region24: #{sequentialmodel_forward_t.1} parent=19 // pred_fallthru
          _
      $region20: #{sequentialmodel_forward_t.1} parent=5 // pred_fallthru
        _
      %p115 = scmp.le.s32.totalorder 1, %s11
      %p116 = scmp.lt.s32.totalorder %s11, 3
      %p117 = pnand %p115, %p116
      %p118 = pneg %p117
      // Predicated region
      $region25: #{sequentialmodel_forward_t.1} parent=5 // pred_check
        _
      $region26: #{sequentialmodel_forward_t.1} parent=5 // pred_check_branch
        %120 = sbr.rel (%p117) target = $region28
      $region27: #{sequentialmodel_forward_t.1} parent=5 // pred_region
        %s121 = ssub.s32 %s11, 1
        %s122 = smul.u32 4, %s16
        %p123 = scmp.lt.s32.totalorder %s122, 7
        %s124 = scalar_select %p123, %s122, 7
        %s125 = smul.addr %s124, 2
        %s126 = scalar_lea.vmem %s0, %s125
        %p127 = pneg %p37
        %p128 = pneg %p34
        %p129 = pneg %p58
        %p130 = pneg %p55
        %p131 = pneg %p84
        %p132 = pneg %p81
        %s133 = sand.u32 %s71, 1
        %s134 = scalar_lea.sflag [#allocation3], %s133
        %s135 = sand.u32 %s71, 1
        %s136 = smul.addr %s135, 4
        %s137 = scalar_lea.vmem [#allocation2], %s136
        %s138 = smul.u32 4, %s16
        %p139 = scmp.lt.s32.totalorder %s138, 7
        %s140 = scalar_select %p139, %s138, 7
        %s141 = smul.addr %s140, 2
        %s142 = scalar_lea.vmem %s0, %s141
        %s143 = smul.u32 4, %s16
        %s144 = smul.u32 4, %s16
        %v145 = vld [vmem:[%s142] sm:$0xff]
        %v146 = vld [vmem:[%s1 + $0x70] sm:$0xff]
        %v147 = vld [vmem:[%s1 + $0x78] sm:$0xff]
        %v148 = vld [vmem:[%s1 + $0x80] sm:$0xff]
        %v149 = vld [vmem:[%s1 + $0x88] sm:$0xff]
        %v150 = vld [vmem:[%s1 + $0x90] sm:$0xff]
        %v151 = vld [vmem:[%s1 + $0x98] sm:$0xff]
        %v152 = vld [vmem:[%s1 + $0xa0] sm:$0x3]
        %v153 = vld [vmem:[%s1 + $0xa8] sm:$0xff]
        %v154 = vld [vmem:[%s1 + $0xb0] sm:$0xff]
        %v155 = vld [vmem:[%s1 + $0xb8] sm:$0xff]
        %v156 = vld [vmem:[%s1 + $0xc0] sm:$0xff]
        %v157 = vld [vmem:[%s1 + $0xc8] sm:$0xff]
        %v158 = vld [vmem:[%s1 + $0xd0] sm:$0xff]
        %v159 = vld [vmem:[%s1 + $0xd8] sm:$0x3]
        %161 = vset.pattern.permute.xlu0 0
        %162 = vperm.xlu0 %161, %v146
        %v163 = vpop.permute.xlu0 %162
        %166 = vset.pattern.permute.xlu0 0
        %167 = vperm.xlu0 %166, %v147
        %v168 = vpop.permute.xlu0 %167
        %171 = vset.pattern.permute.xlu0 0
        %172 = vperm.xlu0 %171, %v148
        %v173 = vpop.permute.xlu0 %172
        %176 = vset.pattern.permute.xlu0 0
        %177 = vperm.xlu0 %176, %v149
        %v178 = vpop.permute.xlu0 %177
        %181 = vset.pattern.permute.xlu0 0
        %182 = vperm.xlu0 %181, %v150
        %v183 = vpop.permute.xlu0 %182
        %186 = vset.pattern.permute.xlu0 0
        %187 = vperm.xlu0 %186, %v151
        %v188 = vpop.permute.xlu0 %187
        %191 = vset.pattern.permute.xlu0 0
        %192 = vperm.xlu0 %191, %v152
        %v193 = vpop.permute.xlu0 %192
        %v196 = vlaneseq
        %v197 = vshrl.u32 %v196, 7
        %v198 = vsub.s32 0, %v197
        %v199 = vrot.slane %v145, %v198
        %v200 = vlaneseq
        %v201 = vshrl.u32 %v200, 7
        %v202 = vsub.s32 2, %v201
        %v203 = vrot.slane %v145, %v202
        %v204 = vlaneseq
        %v205 = vshrl.u32 %v204, 7
        %v206 = vsub.s32 4, %v205
        %v207 = vrot.slane %v145, %v206
        %v208 = vlaneseq
        %v209 = vshrl.u32 %v208, 7
        %v210 = vsub.s32 6, %v209
        %v211 = vrot.slane %v145, %v210
        %v216 = vlaneseq
        %v217 = vshrl.u32 %v216, 7
        %v218 = vsub.s32 0, %v217
        %v219 = vrot.slane %v199, %v218
        %v220 = vlaneseq
        %v221 = vshrl.u32 %v220, 7
        %v222 = vsub.s32 0, %v221
        %v223 = vrot.slane %v203, %v222
        %v224 = vlaneseq
        %v225 = vshrl.u32 %v224, 7
        %v226 = vsub.s32 0, %v225
        %v227 = vrot.slane %v207, %v226
        %v228 = vlaneseq
        %v229 = vshrl.u32 %v228, 7
        %v230 = vsub.s32 0, %v229
        %v231 = vrot.slane %v211, %v230
        %v232 = vmul.f32 %v163, %v219
        %v233 = vmul.f32 %v163, %v223
        %v234 = vmul.f32 %v163, %v227
        %v235 = vmul.f32 %v163, %v231
        %v236 = vmul.f32 %v168, %v219
        %v237 = vmul.f32 %v168, %v223
        %v238 = vmul.f32 %v168, %v227
        %v239 = vmul.f32 %v168, %v231
        %v240 = vmul.f32 %v173, %v219
        %v241 = vmul.f32 %v173, %v223
        %v242 = vmul.f32 %v173, %v227
        %v243 = vmul.f32 %v173, %v231
        %v244 = vmul.f32 %v178, %v219
        %v245 = vmul.f32 %v178, %v223
        %v246 = vmul.f32 %v178, %v227
        %v247 = vmul.f32 %v178, %v231
        %v248 = vmul.f32 %v183, %v219
        %v249 = vmul.f32 %v183, %v223
        %v250 = vmul.f32 %v183, %v227
        %v251 = vmul.f32 %v183, %v231
        %v252 = vmul.f32 %v188, %v219
        %v253 = vmul.f32 %v188, %v223
        %v254 = vmul.f32 %v188, %v227
        %v255 = vmul.f32 %v188, %v231
        %v256 = vmul.f32 %v193, %v219
        %v257 = vmul.f32 %v193, %v223
        %v258 = vmul.f32 %v193, %v227
        %v259 = vmul.f32 %v193, %v231
        %260 = vset.pattern.permute.xlu0 1
        %261 = vperm.xlu0 %260, %v146
        %v262 = vpop.permute.xlu0 %261
        %264 = vset.pattern.permute.xlu0 1
        %265 = vperm.xlu0 %264, %v147
        %v266 = vpop.permute.xlu0 %265
        %268 = vset.pattern.permute.xlu0 1
        %269 = vperm.xlu0 %268, %v148
        %v270 = vpop.permute.xlu0 %269
        %272 = vset.pattern.permute.xlu0 1
        %273 = vperm.xlu0 %272, %v149
        %v274 = vpop.permute.xlu0 %273
        %276 = vset.pattern.permute.xlu0 1
        %277 = vperm.xlu0 %276, %v150
        %v278 = vpop.permute.xlu0 %277
        %280 = vset.pattern.permute.xlu0 1
        %281 = vperm.xlu0 %280, %v151
        %v282 = vpop.permute.xlu0 %281
        %284 = vset.pattern.permute.xlu0 1
        %285 = vperm.xlu0 %284, %v152
        %v286 = vpop.permute.xlu0 %285
        %v288 = vlaneseq
        %v289 = vshrl.u32 %v288, 7
        %v290 = vsub.s32 1, %v289
        %v291 = vrot.slane %v145, %v290
        %v292 = vlaneseq
        %v293 = vshrl.u32 %v292, 7
        %v294 = vsub.s32 3, %v293
        %v295 = vrot.slane %v145, %v294
        %v296 = vlaneseq
        %v297 = vshrl.u32 %v296, 7
        %v298 = vsub.s32 5, %v297
        %v299 = vrot.slane %v145, %v298
        %v300 = vlaneseq
        %v301 = vshrl.u32 %v300, 7
        %v302 = vsub.s32 7, %v301
        %v303 = vrot.slane %v145, %v302
        %v308 = vlaneseq
        %v309 = vshrl.u32 %v308, 7
        %v310 = vsub.s32 1, %v309
        %v311 = vrot.slane %v291, %v310
        %v312 = vlaneseq
        %v313 = vshrl.u32 %v312, 7
        %v314 = vsub.s32 1, %v313
        %v315 = vrot.slane %v295, %v314
        %v316 = vlaneseq
        %v317 = vshrl.u32 %v316, 7
        %v318 = vsub.s32 1, %v317
        %v319 = vrot.slane %v299, %v318
        %v320 = vlaneseq
        %v321 = vshrl.u32 %v320, 7
        %v322 = vsub.s32 1, %v321
        %v323 = vrot.slane %v303, %v322
        %v324 = vmul.f32 %v262, %v311
        %v325 = vmul.f32 %v262, %v315
        %v326 = vmul.f32 %v262, %v319
        %v327 = vmul.f32 %v262, %v323
        %v328 = vmul.f32 %v266, %v311
        %v329 = vmul.f32 %v266, %v315
        %v330 = vmul.f32 %v266, %v319
        %v331 = vmul.f32 %v266, %v323
        %v332 = vmul.f32 %v270, %v311
        %v333 = vmul.f32 %v270, %v315
        %v334 = vmul.f32 %v270, %v319
        %v335 = vmul.f32 %v270, %v323
        %v336 = vmul.f32 %v274, %v311
        %v337 = vmul.f32 %v274, %v315
        %v338 = vmul.f32 %v274, %v319
        %v339 = vmul.f32 %v274, %v323
        %v340 = vmul.f32 %v278, %v311
        %v341 = vmul.f32 %v278, %v315
        %v342 = vmul.f32 %v278, %v319
        %v343 = vmul.f32 %v278, %v323
        %v344 = vmul.f32 %v282, %v311
        %v345 = vmul.f32 %v282, %v315
        %v346 = vmul.f32 %v282, %v319
        %v347 = vmul.f32 %v282, %v323
        %v348 = vmul.f32 %v286, %v311
        %v349 = vmul.f32 %v286, %v315
        %v350 = vmul.f32 %v286, %v319
        %v351 = vmul.f32 %v286, %v323
        %v352 = vadd.f32 %v232, %v324
        %v353 = vadd.f32 %v233, %v325
        %v354 = vadd.f32 %v234, %v326
        %v355 = vadd.f32 %v235, %v327
        %v356 = vadd.f32 %v236, %v328
        %v357 = vadd.f32 %v237, %v329
        %v358 = vadd.f32 %v238, %v330
        %v359 = vadd.f32 %v239, %v331
        %v360 = vadd.f32 %v240, %v332
        %v361 = vadd.f32 %v241, %v333
        %v362 = vadd.f32 %v242, %v334
        %v363 = vadd.f32 %v243, %v335
        %v364 = vadd.f32 %v244, %v336
        %v365 = vadd.f32 %v245, %v337
        %v366 = vadd.f32 %v246, %v338
        %v367 = vadd.f32 %v247, %v339
        %v368 = vadd.f32 %v248, %v340
        %v369 = vadd.f32 %v249, %v341
        %v370 = vadd.f32 %v250, %v342
        %v371 = vadd.f32 %v251, %v343
        %v372 = vadd.f32 %v252, %v344
        %v373 = vadd.f32 %v253, %v345
        %v374 = vadd.f32 %v254, %v346
        %v375 = vadd.f32 %v255, %v347
        %v376 = vadd.f32 %v256, %v348
        %v377 = vadd.f32 %v257, %v349
        %v378 = vadd.f32 %v258, %v350
        %v379 = vadd.f32 %v259, %v351
        %381 = vset.pattern.permute.xlu0 0
        %382 = vperm.xlu0 %381, %v153
        %v383 = vpop.permute.xlu0 %382
        %386 = vset.pattern.permute.xlu0 0
        %387 = vperm.xlu0 %386, %v154
        %v388 = vpop.permute.xlu0 %387
        %391 = vset.pattern.permute.xlu0 0
        %392 = vperm.xlu0 %391, %v155
        %v393 = vpop.permute.xlu0 %392
        %396 = vset.pattern.permute.xlu0 0
        %397 = vperm.xlu0 %396, %v156
        %v398 = vpop.permute.xlu0 %397
        %401 = vset.pattern.permute.xlu0 0
        %402 = vperm.xlu0 %401, %v157
        %v403 = vpop.permute.xlu0 %402
        %406 = vset.pattern.permute.xlu0 0
        %407 = vperm.xlu0 %406, %v158
        %v408 = vpop.permute.xlu0 %407
        %411 = vset.pattern.permute.xlu0 0
        %412 = vperm.xlu0 %411, %v159
        %v413 = vpop.permute.xlu0 %412
        %v415 = vadd.f32 %v352, %v383
        %v416 = vadd.f32 %v353, %v383
        %v417 = vadd.f32 %v354, %v383
        %v418 = vadd.f32 %v355, %v383
        %v419 = vadd.f32 %v356, %v388
        %v420 = vadd.f32 %v357, %v388
        %v421 = vadd.f32 %v358, %v388
        %v422 = vadd.f32 %v359, %v388
        %v423 = vadd.f32 %v360, %v393
        %v424 = vadd.f32 %v361, %v393
        %v425 = vadd.f32 %v362, %v393
        %v426 = vadd.f32 %v363, %v393
        %v427 = vadd.f32 %v364, %v398
        %v428 = vadd.f32 %v365, %v398
        %v429 = vadd.f32 %v366, %v398
        %v430 = vadd.f32 %v367, %v398
        %v431 = vadd.f32 %v368, %v403
        %v432 = vadd.f32 %v369, %v403
        %v433 = vadd.f32 %v370, %v403
        %v434 = vadd.f32 %v371, %v403
        %v435 = vadd.f32 %v372, %v408
        %v436 = vadd.f32 %v373, %v408
        %v437 = vadd.f32 %v374, %v408
        %v438 = vadd.f32 %v375, %v408
        %v439 = vadd.f32 %v376, %v413
        %v440 = vadd.f32 %v377, %v413
        %v441 = vadd.f32 %v378, %v413
        %v442 = vadd.f32 %v379, %v413
        %v443 = vtanh.pop %v415
        %v444 = vtanh.pop %v416
        %v445 = vtanh.pop %v417
        %v446 = vtanh.pop %v418
        %v447 = vtanh.pop %v419
        %v448 = vtanh.pop %v420
        %v449 = vtanh.pop %v421
        %v450 = vtanh.pop %v422
        %v451 = vtanh.pop %v423
        %v452 = vtanh.pop %v424
        %v453 = vtanh.pop %v425
        %v454 = vtanh.pop %v426
        %v455 = vtanh.pop %v427
        %v456 = vtanh.pop %v428
        %v457 = vtanh.pop %v429
        %v458 = vtanh.pop %v430
        %v459 = vtanh.pop %v431
        %v460 = vtanh.pop %v432
        %v461 = vtanh.pop %v433
        %v462 = vtanh.pop %v434
        %v463 = vtanh.pop %v435
        %v464 = vtanh.pop %v436
        %v465 = vtanh.pop %v437
        %v466 = vtanh.pop %v438
        %v467 = vtanh.pop %v439
        %v468 = vtanh.pop %v440
        %v469 = vtanh.pop %v441
        %v470 = vtanh.pop %v442
        %v471 = vld [vmem:[%s1] sm:$0xff]
        %v472 = vld [vmem:[%s1 + $0x8] sm:$0xff]
        %v473 = vld [vmem:[%s1 + $0x10] sm:$0xff]
        %v474 = vld [vmem:[%s1 + $0x18] sm:$0xff]
        %v475 = vld [vmem:[%s1 + $0x20] sm:$0xff]
        %v476 = vld [vmem:[%s1 + $0x28] sm:$0xff]
        %v477 = vld [vmem:[%s1 + $0x30] sm:$0x3]
        %v478 = vld [vmem:[%s1 + $0xe0] sm:$0xff]
        %v479 = vld [vmem:[%s1 + $0xe8] sm:$0xff]
        %v480 = vld [vmem:[%s1 + $0xf0] sm:$0xff]
        %v481 = vld [vmem:[%s1 + $0xf8] sm:$0xff]
        %v482 = vld [vmem:[%s1 + $0x100] sm:$0xff]
        %v483 = vld [vmem:[%s1 + $0x108] sm:$0xff]
        %v484 = vld [vmem:[%s1 + $0x110] sm:$0x3]
        %486 = vset.pattern.permute.xlu0 0
        %487 = vperm.xlu0 %486, %v478
        %v488 = vpop.permute.xlu0 %487
        %491 = vset.pattern.permute.xlu0 0
        %492 = vperm.xlu0 %491, %v479
        %v493 = vpop.permute.xlu0 %492
        %496 = vset.pattern.permute.xlu0 0
        %497 = vperm.xlu0 %496, %v480
        %v498 = vpop.permute.xlu0 %497
        %501 = vset.pattern.permute.xlu0 0
        %502 = vperm.xlu0 %501, %v481
        %v503 = vpop.permute.xlu0 %502
        %506 = vset.pattern.permute.xlu0 0
        %507 = vperm.xlu0 %506, %v482
        %v508 = vpop.permute.xlu0 %507
        %511 = vset.pattern.permute.xlu0 0
        %512 = vperm.xlu0 %511, %v483
        %v513 = vpop.permute.xlu0 %512
        %516 = vset.pattern.permute.xlu0 0
        %517 = vperm.xlu0 %516, %v484
        %v518 = vpop.permute.xlu0 %517
        %vm520 = vcmask 408576
        %v522 = vsel %vm520, %v471, 0
        %v525 = vsel %vm520, %v472, 0
        %v528 = vsel %vm520, %v473, 0
        %v531 = vsel %vm520, %v474, 0
        %v534 = vsel %vm520, %v475, 0
        %v537 = vsel %vm520, %v476, 0
        %v540 = vsel %vm520, %v477, 0
        %vm542 = vcmask 1041408
        %v544 = vsel %vm542, %v467, 0
        %v547 = vsel %vm542, %v468, 0
        %v550 = vsel %vm542, %v469, 0
        %v553 = vsel %vm542, %v470, 0
        %555 = vmatprep.subr.mxu0 %v444
        %556 = vmatpush1.msra.mxu0 %v443
        %557 = vmatprep.subr.mxu0 %v448
        %558 = vmatpush1.msra.mxu0 %v447
        %559 = vmatprep.subr.mxu0 %v452
        %560 = vmatpush1.msra.mxu0 %v451
        %561 = vmatprep.subr.mxu0 %v456
        %562 = vmatpush1.msra.mxu0 %v455
        %563 = vmatprep.subr.mxu0 %v460
        %564 = vmatpush1.msra.mxu0 %v459
        %565 = vmatprep.subr.mxu0 %v464
        %566 = vmatpush1.msra.mxu0 %v463
        %567 = vmatprep.subr.mxu0 %v547
        %568 = vmatpush1.msra.mxu0 %v544
        %569 = vmatprep.subr.mxu0 0.0
        %570 = vmatpush1.msra.mxu0 0.0
        %571 = vmatprep.subr.mxu0 0.0
        %572 = vmatpush1.msra.mxu0 0.0
        %573 = vmatprep.subr.mxu0 0.0
        %574 = vmatpush1.msra.mxu0 0.0
        %575 = vmatprep.subr.mxu0 0.0
        %576 = vmatpush1.msra.mxu0 0.0
        %577 = vmatprep.subr.mxu0 0.0
        %578 = vmatpush1.msra.mxu0 0.0
        %579 = vmatprep.subr.mxu0 0.0
        %580 = vmatpush1.msra.mxu0 0.0
        %581 = vmatprep.subr.mxu0 0.0
        %582 = vmatpush1.msra.mxu0 0.0
        %583 = vmatprep.subr.mxu0 0.0
        %584 = vmatpush1.msra.mxu0 0.0
        %585 = vmatprep.subr.mxu0 0.0
        %586 = vmatpush1.msra.mxu0 0.0
        %587 = vmatprep.subr.mxu0 0.0
        %588 = vmatpush1.msra.mxu0 0.0
        %589 = vmatprep.subr.mxu0 0.0
        %590 = vmatpush1.msra.mxu0 0.0
        %591 = vmatprep.subr.mxu0 0.0
        %592 = vmatpush1.msra.mxu0 0.0
        %593 = vmatprep.subr.mxu0 0.0
        %594 = vmatpush1.msra.mxu0 0.0
        %595 = vmatprep.subr.mxu0 0.0
        %596 = vmatpush1.msra.mxu0 0.0
        %597 = vmatprep.subr.mxu0 0.0
        %598 = vmatpush1.msra.mxu0 0.0
        %599 = vmatprep.subr.mxu0 0.0
        %600 = vmatpush1.msra.mxu0 0.0
        %601 = vmatprep.subr.mxu0 0.0
        %602 = vmatpush1.msra.mxu0 0.0
        %603 = vmatprep.subr.mxu0 0.0
        %604 = vmatpush1.msra.mxu0 0.0
        %605 = vmatprep.subr.mxu0 0.0
        %606 = vmatpush1.msra.mxu0 0.0
        %607 = vmatprep.subr.mxu0 0.0
        %608 = vmatpush1.msra.mxu0 0.0
        %609 = vmatprep.subr.mxu0 0.0
        %610 = vmatpush1.msra.mxu0 0.0
        %611 = vmatprep.subr.mxu0 0.0
        %612 = vmatpush1.msra.mxu0 0.0
        %613 = vmatprep.subr.mxu0 0.0
        %614 = vmatpush1.msra.mxu0 0.0
        %615 = vmatprep.subr.mxu0 0.0
        %616 = vmatpush1.msra.mxu0 0.0
        %617 = vmatprep.subr.mxu0 0.0
        %618 = vmatpush1.msra.mxu0 0.0
        %619 = vmatprep.mubr.f32.mxu0 0.0
        %620 = vmatmul.mubr.f32.gmra.mrb[0].mxu0 %v522
        %v621 = vpop.f32.mrb[0].mxu0
        %v622 = vadd.f32 %v488, %v621
        %v623 = vpop.f32.mrb[0].mxu0
        %v624 = vadd.f32 %v488, %v623
        %625 = vmatprep.mubr.f32.mxu0 0.0
        %626 = vmatmul.mubr.f32.gmra.mrb[0].mxu0 %v525
        %v627 = vpop.f32.mrb[0].mxu0
        %v628 = vadd.f32 %v493, %v627
        %v629 = vpop.f32.mrb[0].mxu0
        %v630 = vadd.f32 %v493, %v629
        %631 = vmatprep.mubr.f32.mxu0 0.0
        %632 = vmatmul.mubr.f32.gmra.mrb[0].mxu0 %v528
        %v633 = vpop.f32.mrb[0].mxu0
        %v634 = vadd.f32 %v498, %v633
        %v635 = vpop.f32.mrb[0].mxu0
        %v636 = vadd.f32 %v498, %v635
        %637 = vmatprep.mubr.f32.mxu0 0.0
        %638 = vmatmul.mubr.f32.gmra.mrb[0].mxu0 %v531
        %v639 = vpop.f32.mrb[0].mxu0
        %v640 = vadd.f32 %v503, %v639
        %v641 = vpop.f32.mrb[0].mxu0
        %v642 = vadd.f32 %v503, %v641
        %643 = vmatprep.mubr.f32.mxu0 0.0
        %644 = vmatmul.mubr.f32.gmra.mrb[0].mxu0 %v534
        %v645 = vpop.f32.mrb[0].mxu0
        %v646 = vadd.f32 %v508, %v645
        %v647 = vpop.f32.mrb[0].mxu0
        %v648 = vadd.f32 %v508, %v647
        %649 = vmatprep.mubr.f32.mxu0 0.0
        %650 = vmatmul.mubr.f32.gmra.mrb[0].mxu0 %v537
        %v651 = vpop.f32.mrb[0].mxu0
        %v652 = vadd.f32 %v513, %v651
        %v653 = vpop.f32.mrb[0].mxu0
        %v654 = vadd.f32 %v513, %v653
        %655 = vmatprep.mubr.f32.mxu0 0.0
        %656 = vmatmul.mubr.f32.gmra.mrb[0].mxu0 %v540
        %v657 = vpop.f32.mrb[0].mxu0
        %v658 = vadd.f32 %v518, %v657
        %v659 = vpop.f32.mrb[0].mxu0
        %v660 = vadd.f32 %v518, %v659
        %661 = vdwg.mxu0
        %662 = vmatprep.subr.mxu0 %v446
        %663 = vmatpush1.msra.mxu0 %v445
        %664 = vmatprep.subr.mxu0 %v450
        %665 = vmatpush1.msra.mxu0 %v449
        %666 = vmatprep.subr.mxu0 %v454
        %667 = vmatpush1.msra.mxu0 %v453
        %668 = vmatprep.subr.mxu0 %v458
        %669 = vmatpush1.msra.mxu0 %v457
        %670 = vmatprep.subr.mxu0 %v462
        %671 = vmatpush1.msra.mxu0 %v461
        %672 = vmatprep.subr.mxu0 %v466
        %673 = vmatpush1.msra.mxu0 %v465
        %674 = vmatprep.subr.mxu0 %v553
        %675 = vmatpush1.msra.mxu0 %v550
        %676 = vmatprep.subr.mxu0 0.0
        %677 = vmatpush1.msra.mxu0 0.0
        %678 = vmatprep.subr.mxu0 0.0
        %679 = vmatpush1.msra.mxu0 0.0
        %680 = vmatprep.subr.mxu0 0.0
        %681 = vmatpush1.msra.mxu0 0.0
        %682 = vmatprep.subr.mxu0 0.0
        %683 = vmatpush1.msra.mxu0 0.0
        %684 = vmatprep.subr.mxu0 0.0
        %685 = vmatpush1.msra.mxu0 0.0
        %686 = vmatprep.subr.mxu0 0.0
        %687 = vmatpush1.msra.mxu0 0.0
        %688 = vmatprep.subr.mxu0 0.0
        %689 = vmatpush1.msra.mxu0 0.0
        %690 = vmatprep.subr.mxu0 0.0
        %691 = vmatpush1.msra.mxu0 0.0
        %692 = vmatprep.subr.mxu0 0.0
        %693 = vmatpush1.msra.mxu0 0.0
        %694 = vmatprep.subr.mxu0 0.0
        %695 = vmatpush1.msra.mxu0 0.0
        %696 = vmatprep.subr.mxu0 0.0
        %697 = vmatpush1.msra.mxu0 0.0
        %698 = vmatprep.subr.mxu0 0.0
        %699 = vmatpush1.msra.mxu0 0.0
        %700 = vmatprep.subr.mxu0 0.0
        %701 = vmatpush1.msra.mxu0 0.0
        %702 = vmatprep.subr.mxu0 0.0
        %703 = vmatpush1.msra.mxu0 0.0
        %704 = vmatprep.subr.mxu0 0.0
        %705 = vmatpush1.msra.mxu0 0.0
        %706 = vmatprep.subr.mxu0 0.0
        %707 = vmatpush1.msra.mxu0 0.0
        %708 = vmatprep.subr.mxu0 0.0
        %709 = vmatpush1.msra.mxu0 0.0
        %710 = vmatprep.subr.mxu0 0.0
        %711 = vmatpush1.msra.mxu0 0.0
        %712 = vmatprep.subr.mxu0 0.0
        %713 = vmatpush1.msra.mxu0 0.0
        %714 = vmatprep.subr.mxu0 0.0
        %715 = vmatpush1.msra.mxu0 0.0
        %716 = vmatprep.subr.mxu0 0.0
        %717 = vmatpush1.msra.mxu0 0.0
        %718 = vmatprep.subr.mxu0 0.0
        %719 = vmatpush1.msra.mxu0 0.0
        %720 = vmatprep.subr.mxu0 0.0
        %721 = vmatpush1.msra.mxu0 0.0
        %722 = vmatprep.subr.mxu0 0.0
        %723 = vmatpush1.msra.mxu0 0.0
        %724 = vmatprep.subr.mxu0 0.0
        %725 = vmatpush1.msra.mxu0 0.0
        %726 = vmatprep.mubr.f32.mxu0 0.0
        %727 = vmatmul.mubr.f32.gmra.mrb[0].mxu0 %v522
        %v728 = vpop.f32.mrb[0].mxu0
        %v729 = vadd.f32 %v488, %v728
        %v730 = vpop.f32.mrb[0].mxu0
        %v731 = vadd.f32 %v488, %v730
        %732 = vmatprep.mubr.f32.mxu0 0.0
        %733 = vmatmul.mubr.f32.gmra.mrb[0].mxu0 %v525
        %v734 = vpop.f32.mrb[0].mxu0
        %v735 = vadd.f32 %v493, %v734
        %v736 = vpop.f32.mrb[0].mxu0
        %v737 = vadd.f32 %v493, %v736
        %738 = vmatprep.mubr.f32.mxu0 0.0
        %739 = vmatmul.mubr.f32.gmra.mrb[0].mxu0 %v528
        %v740 = vpop.f32.mrb[0].mxu0
        %v741 = vadd.f32 %v498, %v740
        %v742 = vpop.f32.mrb[0].mxu0
        %v743 = vadd.f32 %v498, %v742
        %744 = vmatprep.mubr.f32.mxu0 0.0
        %745 = vmatmul.mubr.f32.gmra.mrb[0].mxu0 %v531
        %v746 = vpop.f32.mrb[0].mxu0
        %v747 = vadd.f32 %v503, %v746
        %v748 = vpop.f32.mrb[0].mxu0
        %v749 = vadd.f32 %v503, %v748
        %750 = vmatprep.mubr.f32.mxu0 0.0
        %751 = vmatmul.mubr.f32.gmra.mrb[0].mxu0 %v534
        %v752 = vpop.f32.mrb[0].mxu0
        %v753 = vadd.f32 %v508, %v752
        %v754 = vpop.f32.mrb[0].mxu0
        %v755 = vadd.f32 %v508, %v754
        %756 = vmatprep.mubr.f32.mxu0 0.0
        %757 = vmatmul.mubr.f32.gmra.mrb[0].mxu0 %v537
        %v758 = vpop.f32.mrb[0].mxu0
        %v759 = vadd.f32 %v513, %v758
        %v760 = vpop.f32.mrb[0].mxu0
        %v761 = vadd.f32 %v513, %v760
        %762 = vmatprep.mubr.f32.mxu0 0.0
        %763 = vmatmul.mubr.f32.gmra.mrb[0].mxu0 %v540
        %v764 = vpop.f32.mrb[0].mxu0
        %v765 = vadd.f32 %v518, %v764
        %v766 = vpop.f32.mrb[0].mxu0
        %v767 = vadd.f32 %v518, %v766
        %768 = vdwg.mxu0
        %v769 = vtanh.pop %v622
        %v770 = vtanh.pop %v624
        %v771 = vtanh.pop %v729
        %v772 = vtanh.pop %v731
        %v773 = vtanh.pop %v628
        %v774 = vtanh.pop %v630
        %v775 = vtanh.pop %v735
        %v776 = vtanh.pop %v737
        %v777 = vtanh.pop %v634
        %v778 = vtanh.pop %v636
        %v779 = vtanh.pop %v741
        %v780 = vtanh.pop %v743
        %v781 = vtanh.pop %v640
        %v782 = vtanh.pop %v642
        %v783 = vtanh.pop %v747
        %v784 = vtanh.pop %v749
        %v785 = vtanh.pop %v646
        %v786 = vtanh.pop %v648
        %v787 = vtanh.pop %v753
        %v788 = vtanh.pop %v755
        %v789 = vtanh.pop %v652
        %v790 = vtanh.pop %v654
        %v791 = vtanh.pop %v759
        %v792 = vtanh.pop %v761
        %v793 = vtanh.pop %v658
        %v794 = vtanh.pop %v660
        %v795 = vtanh.pop %v765
        %v796 = vtanh.pop %v767
        %v797 = vld [vmem:[%s1 + $0x38] sm:$0xff]
        %v798 = vld [vmem:[%s1 + $0x40] sm:$0xff]
        %v799 = vld [vmem:[%s1 + $0x48] sm:$0xff]
        %v800 = vld [vmem:[%s1 + $0x50] sm:$0xff]
        %v801 = vld [vmem:[%s1 + $0x58] sm:$0xff]
        %v802 = vld [vmem:[%s1 + $0x60] sm:$0xff]
        %v803 = vld [vmem:[%s1 + $0x68] sm:$0x3]
        %v804 = vld [vmem:[%s1 + $0x118] sm:$0xff]
        %v805 = vld [vmem:[%s1 + $0x120] sm:$0xff]
        %v806 = vld [vmem:[%s1 + $0x128] sm:$0xff]
        %v807 = vld [vmem:[%s1 + $0x130] sm:$0xff]
        %v808 = vld [vmem:[%s1 + $0x138] sm:$0xff]
        %v809 = vld [vmem:[%s1 + $0x140] sm:$0xff]
        %v810 = vld [vmem:[%s1 + $0x148] sm:$0x3]
        %812 = vset.pattern.permute.xlu0 0
        %813 = vperm.xlu0 %812, %v804
        %v814 = vpop.permute.xlu0 %813
        %817 = vset.pattern.permute.xlu0 0
        %818 = vperm.xlu0 %817, %v805
        %v819 = vpop.permute.xlu0 %818
        %822 = vset.pattern.permute.xlu0 0
        %823 = vperm.xlu0 %822, %v806
        %v824 = vpop.permute.xlu0 %823
        %827 = vset.pattern.permute.xlu0 0
        %828 = vperm.xlu0 %827, %v807
        %v829 = vpop.permute.xlu0 %828
        %832 = vset.pattern.permute.xlu0 0
        %833 = vperm.xlu0 %832, %v808
        %v834 = vpop.permute.xlu0 %833
        %837 = vset.pattern.permute.xlu0 0
        %838 = vperm.xlu0 %837, %v809
        %v839 = vpop.permute.xlu0 %838
        %842 = vset.pattern.permute.xlu0 0
        %843 = vperm.xlu0 %842, %v810
        %v844 = vpop.permute.xlu0 %843
        %v847 = vsel %vm520, %v797, 0
        %v850 = vsel %vm520, %v798, 0
        %v853 = vsel %vm520, %v799, 0
        %v856 = vsel %vm520, %v800, 0
        %v859 = vsel %vm520, %v801, 0
        %v862 = vsel %vm520, %v802, 0
        %v865 = vsel %vm520, %v803, 0
        %v868 = vsel %vm542, %v793, 0
        %v871 = vsel %vm542, %v794, 0
        %v874 = vsel %vm542, %v795, 0
        %v877 = vsel %vm542, %v796, 0
        %879 = vmatprep.subr.mxu0 %v770
        %880 = vmatpush1.msra.mxu0 %v769
        %881 = vmatprep.subr.mxu0 %v774
        %882 = vmatpush1.msra.mxu0 %v773
        %883 = vmatprep.subr.mxu0 %v778
        %884 = vmatpush1.msra.mxu0 %v777
        %885 = vmatprep.subr.mxu0 %v782
        %886 = vmatpush1.msra.mxu0 %v781
        %887 = vmatprep.subr.mxu0 %v786
        %888 = vmatpush1.msra.mxu0 %v785
        %889 = vmatprep.subr.mxu0 %v790
        %890 = vmatpush1.msra.mxu0 %v789
        %891 = vmatprep.subr.mxu0 %v871
        %892 = vmatpush1.msra.mxu0 %v868
        %893 = vmatprep.subr.mxu0 0.0
        %894 = vmatpush1.msra.mxu0 0.0
        %895 = vmatprep.subr.mxu0 0.0
        %896 = vmatpush1.msra.mxu0 0.0
        %897 = vmatprep.subr.mxu0 0.0
        %898 = vmatpush1.msra.mxu0 0.0
        %899 = vmatprep.subr.mxu0 0.0
        %900 = vmatpush1.msra.mxu0 0.0
        %901 = vmatprep.subr.mxu0 0.0
        %902 = vmatpush1.msra.mxu0 0.0
        %903 = vmatprep.subr.mxu0 0.0
        %904 = vmatpush1.msra.mxu0 0.0
        %905 = vmatprep.subr.mxu0 0.0
        %906 = vmatpush1.msra.mxu0 0.0
        %907 = vmatprep.subr.mxu0 0.0
        %908 = vmatpush1.msra.mxu0 0.0
        %909 = vmatprep.subr.mxu0 0.0
        %910 = vmatpush1.msra.mxu0 0.0
        %911 = vmatprep.subr.mxu0 0.0
        %912 = vmatpush1.msra.mxu0 0.0
        %913 = vmatprep.subr.mxu0 0.0
        %914 = vmatpush1.msra.mxu0 0.0
        %915 = vmatprep.subr.mxu0 0.0
        %916 = vmatpush1.msra.mxu0 0.0
        %917 = vmatprep.subr.mxu0 0.0
        %918 = vmatpush1.msra.mxu0 0.0
        %919 = vmatprep.subr.mxu0 0.0
        %920 = vmatpush1.msra.mxu0 0.0
        %921 = vmatprep.subr.mxu0 0.0
        %922 = vmatpush1.msra.mxu0 0.0
        %923 = vmatprep.subr.mxu0 0.0
        %924 = vmatpush1.msra.mxu0 0.0
        %925 = vmatprep.subr.mxu0 0.0
        %926 = vmatpush1.msra.mxu0 0.0
        %927 = vmatprep.subr.mxu0 0.0
        %928 = vmatpush1.msra.mxu0 0.0
        %929 = vmatprep.subr.mxu0 0.0
        %930 = vmatpush1.msra.mxu0 0.0
        %931 = vmatprep.subr.mxu0 0.0
        %932 = vmatpush1.msra.mxu0 0.0
        %933 = vmatprep.subr.mxu0 0.0
        %934 = vmatpush1.msra.mxu0 0.0
        %935 = vmatprep.subr.mxu0 0.0
        %936 = vmatpush1.msra.mxu0 0.0
        %937 = vmatprep.subr.mxu0 0.0
        %938 = vmatpush1.msra.mxu0 0.0
        %939 = vmatprep.subr.mxu0 0.0
        %940 = vmatpush1.msra.mxu0 0.0
        %941 = vmatprep.subr.mxu0 0.0
        %942 = vmatpush1.msra.mxu0 0.0
        %943 = vmatprep.mubr.f32.mxu0 0.0
        %944 = vmatmul.mubr.f32.gmra.mrb[0].mxu0 %v847
        %v945 = vpop.f32.mrb[0].mxu0
        %v946 = vadd.f32 %v814, %v945
        %v947 = vpop.f32.mrb[0].mxu0
        %v948 = vadd.f32 %v814, %v947
        %949 = vmatprep.mubr.f32.mxu0 0.0
        %950 = vmatmul.mubr.f32.gmra.mrb[0].mxu0 %v850
        %v951 = vpop.f32.mrb[0].mxu0
        %v952 = vadd.f32 %v819, %v951
        %v953 = vpop.f32.mrb[0].mxu0
        %v954 = vadd.f32 %v819, %v953
        %955 = vmatprep.mubr.f32.mxu0 0.0
        %956 = vmatmul.mubr.f32.gmra.mrb[0].mxu0 %v853
        %v957 = vpop.f32.mrb[0].mxu0
        %v958 = vadd.f32 %v824, %v957
        %v959 = vpop.f32.mrb[0].mxu0
        %v960 = vadd.f32 %v824, %v959
        %961 = vmatprep.mubr.f32.mxu0 0.0
        %962 = vmatmul.mubr.f32.gmra.mrb[0].mxu0 %v856
        %v963 = vpop.f32.mrb[0].mxu0
        %v964 = vadd.f32 %v829, %v963
        %v965 = vpop.f32.mrb[0].mxu0
        %v966 = vadd.f32 %v829, %v965
        %967 = vmatprep.mubr.f32.mxu0 0.0
        %968 = vmatmul.mubr.f32.gmra.mrb[0].mxu0 %v859
        %v969 = vpop.f32.mrb[0].mxu0
        %v970 = vadd.f32 %v834, %v969
        %v971 = vpop.f32.mrb[0].mxu0
        %v972 = vadd.f32 %v834, %v971
        %973 = vmatprep.mubr.f32.mxu0 0.0
        %974 = vmatmul.mubr.f32.gmra.mrb[0].mxu0 %v862
        %v975 = vpop.f32.mrb[0].mxu0
        %v976 = vadd.f32 %v839, %v975
        %v977 = vpop.f32.mrb[0].mxu0
        %v978 = vadd.f32 %v839, %v977
        %979 = vmatprep.mubr.f32.mxu0 0.0
        %980 = vmatmul.mubr.f32.gmra.mrb[0].mxu0 %v865
        %v981 = vpop.f32.mrb[0].mxu0
        %v982 = vadd.f32 %v844, %v981
        %v983 = vpop.f32.mrb[0].mxu0
        %v984 = vadd.f32 %v844, %v983
        %985 = vdwg.mxu0
        %986 = vmatprep.subr.mxu0 %v772
        %987 = vmatpush1.msra.mxu0 %v771
        %988 = vmatprep.subr.mxu0 %v776
        %989 = vmatpush1.msra.mxu0 %v775
        %990 = vmatprep.subr.mxu0 %v780
        %991 = vmatpush1.msra.mxu0 %v779
        %992 = vmatprep.subr.mxu0 %v784
        %993 = vmatpush1.msra.mxu0 %v783
        %994 = vmatprep.subr.mxu0 %v788
        %995 = vmatpush1.msra.mxu0 %v787
        %996 = vmatprep.subr.mxu0 %v792
        %997 = vmatpush1.msra.mxu0 %v791
        %998 = vmatprep.subr.mxu0 %v877
        %999 = vmatpush1.msra.mxu0 %v874
        %1000 = vmatprep.subr.mxu0 0.0
        %1001 = vmatpush1.msra.mxu0 0.0
        %1002 = vmatprep.subr.mxu0 0.0
        %1003 = vmatpush1.msra.mxu0 0.0
        %1004 = vmatprep.subr.mxu0 0.0
        %1005 = vmatpush1.msra.mxu0 0.0
        %1006 = vmatprep.subr.mxu0 0.0
        %1007 = vmatpush1.msra.mxu0 0.0
        %1008 = vmatprep.subr.mxu0 0.0
        %1009 = vmatpush1.msra.mxu0 0.0
        %1010 = vmatprep.subr.mxu0 0.0
        %1011 = vmatpush1.msra.mxu0 0.0
        %1012 = vmatprep.subr.mxu0 0.0
        %1013 = vmatpush1.msra.mxu0 0.0
        %1014 = vmatprep.subr.mxu0 0.0
        %1015 = vmatpush1.msra.mxu0 0.0
        %1016 = vmatprep.subr.mxu0 0.0
        %1017 = vmatpush1.msra.mxu0 0.0
        %1018 = vmatprep.subr.mxu0 0.0
        %1019 = vmatpush1.msra.mxu0 0.0
        %1020 = vmatprep.subr.mxu0 0.0
        %1021 = vmatpush1.msra.mxu0 0.0
        %1022 = vmatprep.subr.mxu0 0.0
        %1023 = vmatpush1.msra.mxu0 0.0
        %1024 = vmatprep.subr.mxu0 0.0
        %1025 = vmatpush1.msra.mxu0 0.0
        %1026 = vmatprep.subr.mxu0 0.0
        %1027 = vmatpush1.msra.mxu0 0.0
        %1028 = vmatprep.subr.mxu0 0.0
        %1029 = vmatpush1.msra.mxu0 0.0
        %1030 = vmatprep.subr.mxu0 0.0
        %1031 = vmatpush1.msra.mxu0 0.0
        %1032 = vmatprep.subr.mxu0 0.0
        %1033 = vmatpush1.msra.mxu0 0.0
        %1034 = vmatprep.subr.mxu0 0.0
        %1035 = vmatpush1.msra.mxu0 0.0
        %1036 = vmatprep.subr.mxu0 0.0
        %1037 = vmatpush1.msra.mxu0 0.0
        %1038 = vmatprep.subr.mxu0 0.0
        %1039 = vmatpush1.msra.mxu0 0.0
        %1040 = vmatprep.subr.mxu0 0.0
        %1041 = vmatpush1.msra.mxu0 0.0
        %1042 = vmatprep.subr.mxu0 0.0
        %1043 = vmatpush1.msra.mxu0 0.0
        %1044 = vmatprep.subr.mxu0 0.0
        %1045 = vmatpush1.msra.mxu0 0.0
        %1046 = vmatprep.subr.mxu0 0.0
        %1047 = vmatpush1.msra.mxu0 0.0
        %1048 = vmatprep.subr.mxu0 0.0
        %1049 = vmatpush1.msra.mxu0 0.0
        %1050 = vmatprep.mubr.f32.mxu0 0.0
        %1051 = vmatmul.mubr.f32.gmra.mrb[0].mxu0 %v847
        %v1052 = vpop.f32.mrb[0].mxu0
        %v1053 = vadd.f32 %v814, %v1052
        %v1054 = vpop.f32.mrb[0].mxu0
        %v1055 = vadd.f32 %v814, %v1054
        %1056 = vmatprep.mubr.f32.mxu0 0.0
        %1057 = vmatmul.mubr.f32.gmra.mrb[0].mxu0 %v850
        %v1058 = vpop.f32.mrb[0].mxu0
        %v1059 = vadd.f32 %v819, %v1058
        %v1060 = vpop.f32.mrb[0].mxu0
        %v1061 = vadd.f32 %v819, %v1060
        %1062 = vmatprep.mubr.f32.mxu0 0.0
        %1063 = vmatmul.mubr.f32.gmra.mrb[0].mxu0 %v853
        %v1064 = vpop.f32.mrb[0].mxu0
        %v1065 = vadd.f32 %v824, %v1064
        %v1066 = vpop.f32.mrb[0].mxu0
        %v1067 = vadd.f32 %v824, %v1066
        %1068 = vmatprep.mubr.f32.mxu0 0.0
        %1069 = vmatmul.mubr.f32.gmra.mrb[0].mxu0 %v856
        %v1070 = vpop.f32.mrb[0].mxu0
        %v1071 = vadd.f32 %v829, %v1070
        %v1072 = vpop.f32.mrb[0].mxu0
        %v1073 = vadd.f32 %v829, %v1072
        %1074 = vmatprep.mubr.f32.mxu0 0.0
        %1075 = vmatmul.mubr.f32.gmra.mrb[0].mxu0 %v859
        %v1076 = vpop.f32.mrb[0].mxu0
        %v1077 = vadd.f32 %v834, %v1076
        %v1078 = vpop.f32.mrb[0].mxu0
        %v1079 = vadd.f32 %v834, %v1078
        %1080 = vmatprep.mubr.f32.mxu0 0.0
        %1081 = vmatmul.mubr.f32.gmra.mrb[0].mxu0 %v862
        %v1082 = vpop.f32.mrb[0].mxu0
        %v1083 = vadd.f32 %v839, %v1082
        %v1084 = vpop.f32.mrb[0].mxu0
        %v1085 = vadd.f32 %v839, %v1084
        %1086 = vmatprep.mubr.f32.mxu0 0.0
        %1087 = vmatmul.mubr.f32.gmra.mrb[0].mxu0 %v865
        %v1088 = vpop.f32.mrb[0].mxu0
        %v1089 = vadd.f32 %v844, %v1088
        %v1090 = vpop.f32.mrb[0].mxu0
        %v1091 = vadd.f32 %v844, %v1090
        %1092 = vdwg.mxu0
        %v1093 = vtanh.pop %v946
        %v1094 = vtanh.pop %v948
        %v1095 = vtanh.pop %v1053
        %v1096 = vtanh.pop %v1055
        %v1097 = vtanh.pop %v952
        %v1098 = vtanh.pop %v954
        %v1099 = vtanh.pop %v1059
        %v1100 = vtanh.pop %v1061
        %v1101 = vtanh.pop %v958
        %v1102 = vtanh.pop %v960
        %v1103 = vtanh.pop %v1065
        %v1104 = vtanh.pop %v1067
        %v1105 = vtanh.pop %v964
        %v1106 = vtanh.pop %v966
        %v1107 = vtanh.pop %v1071
        %v1108 = vtanh.pop %v1073
        %v1109 = vtanh.pop %v970
        %v1110 = vtanh.pop %v972
        %v1111 = vtanh.pop %v1077
        %v1112 = vtanh.pop %v1079
        %v1113 = vtanh.pop %v976
        %v1114 = vtanh.pop %v978
        %v1115 = vtanh.pop %v1083
        %v1116 = vtanh.pop %v1085
        %v1117 = vtanh.pop %v982
        %v1118 = vtanh.pop %v984
        %v1119 = vtanh.pop %v1089
        %v1120 = vtanh.pop %v1091
        %v1121 = vld [vmem:[%s1 + $0x150] sm:$0xff]
        %v1122 = vld [vmem:[%s1 + $0x158] sm:$0xff]
        %v1123 = vld [vmem:[%s1 + $0x160] sm:$0xff]
        %v1124 = vld [vmem:[%s1 + $0x168] sm:$0xff]
        %v1125 = vld [vmem:[%s1 + $0x170] sm:$0xff]
        %v1126 = vld [vmem:[%s1 + $0x178] sm:$0xff]
        %v1127 = vld [vmem:[%s1 + $0x180] sm:$0x3]
        %v1128 = vld [vmem:[%s1 + $0x188] sm:$0x1]
        %1130 = vset.pattern.permute.xlu0 0
        %1131 = vperm.xlu0 %1130, %v1121
        %v1132 = vpop.permute.xlu0 %1131
        %1135 = vset.pattern.permute.xlu0 0
        %1136 = vperm.xlu0 %1135, %v1122
        %v1137 = vpop.permute.xlu0 %1136
        %1140 = vset.pattern.permute.xlu0 0
        %1141 = vperm.xlu0 %1140, %v1123
        %v1142 = vpop.permute.xlu0 %1141
        %1145 = vset.pattern.permute.xlu0 0
        %1146 = vperm.xlu0 %1145, %v1124
        %v1147 = vpop.permute.xlu0 %1146
        %1150 = vset.pattern.permute.xlu0 0
        %1151 = vperm.xlu0 %1150, %v1125
        %v1152 = vpop.permute.xlu0 %1151
        %1155 = vset.pattern.permute.xlu0 0
        %1156 = vperm.xlu0 %1155, %v1126
        %v1157 = vpop.permute.xlu0 %1156
        %1160 = vset.pattern.permute.xlu0 0
        %1161 = vperm.xlu0 %1160, %v1127
        %v1162 = vpop.permute.xlu0 %1161
        %v1164 = vmul.f32 %v1093, %v1132
        %v1165 = vmul.f32 %v1094, %v1132
        %v1166 = vmul.f32 %v1095, %v1132
        %v1167 = vmul.f32 %v1096, %v1132
        %v1168 = vmul.f32 %v1097, %v1137
        %v1169 = vmul.f32 %v1098, %v1137
        %v1170 = vmul.f32 %v1099, %v1137
        %v1171 = vmul.f32 %v1100, %v1137
        %v1172 = vmul.f32 %v1101, %v1142
        %v1173 = vmul.f32 %v1102, %v1142
        %v1174 = vmul.f32 %v1103, %v1142
        %v1175 = vmul.f32 %v1104, %v1142
        %v1176 = vmul.f32 %v1105, %v1147
        %v1177 = vmul.f32 %v1106, %v1147
        %v1178 = vmul.f32 %v1107, %v1147
        %v1179 = vmul.f32 %v1108, %v1147
        %v1180 = vmul.f32 %v1109, %v1152
        %v1181 = vmul.f32 %v1110, %v1152
        %v1182 = vmul.f32 %v1111, %v1152
        %v1183 = vmul.f32 %v1112, %v1152
        %v1184 = vmul.f32 %v1113, %v1157
        %v1185 = vmul.f32 %v1114, %v1157
        %v1186 = vmul.f32 %v1115, %v1157
        %v1187 = vmul.f32 %v1116, %v1157
        %v1188 = vmul.f32 %v1117, %v1162
        %v1189 = vmul.f32 %v1118, %v1162
        %v1190 = vmul.f32 %v1119, %v1162
        %v1191 = vmul.f32 %v1120, %v1162
        %v1192 = vadd.f32 %v1164, %v1168
        %v1193 = vadd.f32 %v1192, %v1172
        %v1194 = vadd.f32 %v1193, %v1176
        %v1195 = vadd.f32 %v1194, %v1180
        %v1196 = vadd.f32 %v1195, %v1184
        %v1197 = vsel %vm542, %v1188, 0.0
        %v1198 = vadd.f32 %v1196, %v1197
        %v1199 = vrot.slane %v1198, 4
        %v1200 = vadd.f32 %v1198, %v1199
        %v1201 = vrot.slane %v1200, 2
        %v1202 = vadd.f32 %v1200, %v1201
        %v1203 = vrot.slane %v1202, 1
        %v1204 = vadd.f32 %v1202, %v1203
        %v1205 = vadd.f32 %v1165, %v1169
        %v1206 = vadd.f32 %v1205, %v1173
        %v1207 = vadd.f32 %v1206, %v1177
        %v1208 = vadd.f32 %v1207, %v1181
        %v1209 = vadd.f32 %v1208, %v1185
        %v1210 = vsel %vm542, %v1189, 0.0
        %v1211 = vadd.f32 %v1209, %v1210
        %v1212 = vrot.slane %v1211, 4
        %v1213 = vadd.f32 %v1211, %v1212
        %v1214 = vrot.slane %v1213, 2
        %v1215 = vadd.f32 %v1213, %v1214
        %v1216 = vrot.slane %v1215, 1
        %v1217 = vadd.f32 %v1215, %v1216
        %v1218 = vadd.f32 %v1166, %v1170
        %v1219 = vadd.f32 %v1218, %v1174
        %v1220 = vadd.f32 %v1219, %v1178
        %v1221 = vadd.f32 %v1220, %v1182
        %v1222 = vadd.f32 %v1221, %v1186
        %v1223 = vsel %vm542, %v1190, 0.0
        %v1224 = vadd.f32 %v1222, %v1223
        %v1225 = vrot.slane %v1224, 4
        %v1226 = vadd.f32 %v1224, %v1225
        %v1227 = vrot.slane %v1226, 2
        %v1228 = vadd.f32 %v1226, %v1227
        %v1229 = vrot.slane %v1228, 1
        %v1230 = vadd.f32 %v1228, %v1229
        %v1231 = vadd.f32 %v1167, %v1171
        %v1232 = vadd.f32 %v1231, %v1175
        %v1233 = vadd.f32 %v1232, %v1179
        %v1234 = vadd.f32 %v1233, %v1183
        %v1235 = vadd.f32 %v1234, %v1187
        %v1236 = vsel %vm542, %v1191, 0.0
        %v1237 = vadd.f32 %v1235, %v1236
        %v1238 = vrot.slane %v1237, 4
        %v1239 = vadd.f32 %v1237, %v1238
        %v1240 = vrot.slane %v1239, 2
        %v1241 = vadd.f32 %v1239, %v1240
        %v1242 = vrot.slane %v1241, 1
        %v1243 = vadd.f32 %v1241, %v1242
        %1245 = vset.pattern.permute.xlu0 0
        %1246 = vperm.xlu0 %1245, %v1128
        %v1247 = vpop.permute.xlu0 %1246
        %v1249 = vadd.f32 %v1204, %v1247
        %v1250 = vadd.f32 %v1217, %v1247
        %v1251 = vadd.f32 %v1230, %v1247
        %v1252 = vadd.f32 %v1243, %v1247
        %v1257 = vcombine.low %v1249, %v1250
        %v1258 = vcombine.low %v1251, %v1252
        %v1260 = vunpack.c.l.s4 1966171168
        %v1261 = vunpack.c.0.s8 %v1260
        %v1262 = vlaneseq
        %v1263 = vshrl.u32 %v1262, 7
        %v1264 = vsub.s32 %v1261, %v1263
        %v1265 = vrot.slane %v1257, %v1264
        %v1267 = vunpack.c.l.s4 1966171168
        %v1268 = vunpack.c.0.s8 %v1267
        %v1269 = vlaneseq
        %v1270 = vshrl.u32 %v1269, 7
        %v1271 = vsub.s32 %v1268, %v1270
        %v1272 = vrot.slane %v1258, %v1271
        %v1273 = vcombine.low %v1265, %v1272
        %v1275 = vunpack.c.l.s4 1966171168
        %v1276 = vunpack.c.0.s8 %v1275
        %v1277 = vlaneseq
        %v1278 = vshrl.u32 %v1277, 7
        %v1279 = vsub.s32 %v1276, %v1278
        %v1280 = vrot.slane %v1273, %v1279
        %v1282 = vlaneseq
        %vm1283 = vcmp.ge.s32.totalorder %v1282, 0
        %vm1284 = vcmp.lt.s32.totalorder %v1282, 512
        %vm1285 = vmand %vm1283, %vm1284
        %1286 = vst.msk [vmem:[%s137] sm:$0xf] %vm1285, %v1280
        %s1287 = sand.u32 %s71, 1
        %s1288 = scalar_lea.sflag [#allocation3], %s1287
        %s1289 = sand.u32 %s71, 1
        %s1290 = smul.addr %s1289, 4
        %s1291 = scalar_lea.vmem [#allocation2], %s1290
        // Predicated region
        $region29: #{sequentialmodel_forward_t.1} parent=27 // pred_check
          %p1292 = pneg %p81
        $region30: #{sequentialmodel_forward_t.1} parent=27 // pred_check_branch
          %1294 = sbr.rel (%p1292) target = $region32
        $region31: #{sequentialmodel_forward_t.1} parent=27 // pred_region
          %s1295 = smul.u32 4, %s16
          %s1297 = ssub.s32 64, 64
          %1298 = vsyncadd %s1288, %s1297
          %s1299 = smul.addr %s1295, 16
          %s1300 = scalar_lea.hbm %s2, %s1299
          %s1302 = sshll.u32 %s1291, 4
          %s1303 = int_to_ptr.vmem [resolvable:$true] %s1302
          %1305 = dma.vmem_to_hbm [thread:$0]  %s1303, 64, %s1300, %s1288
        $region32: #{sequentialmodel_forward_t.1} parent=27 // pred_fallthru
          _
      $region28: #{sequentialmodel_forward_t.1} parent=5 // pred_fallthru
        _
      %p1306 = scmp.le.s32.totalorder 2, %s11
      // Predicated region
      $region33: #{sequentialmodel_forward_t.1} parent=5 // pred_check
        %p1307 = pneg %p1306
      $region34: #{sequentialmodel_forward_t.1} parent=5 // pred_check_branch
        %1309 = sbr.rel (%p1307) target = $region36
      $region35: #{sequentialmodel_forward_t.1} parent=5 // pred_region
        %s1310 = ssub.s32 %s11, 2
        // Predicated region
        $region37: #{sequentialmodel_forward_t.1} parent=35 // pred_check
          %p1311 = pneg %p87
        $region38: #{sequentialmodel_forward_t.1} parent=35 // pred_check_branch
          %1313 = sbr.rel (%p1311) target = $region40
        $region39: #{sequentialmodel_forward_t.1} parent=35 // pred_region
          %s1314 = sand.u32 %s72, 1
          %s1315 = scalar_lea.sflag [#allocation3], %s1314
          %s1316 = sand.u32 %s72, 1
          %s1317 = smul.addr %s1316, 4
          %s1318 = scalar_lea.vmem [#allocation2], %s1317
          %1319 = dma.done %s1315, 64
        $region40: #{sequentialmodel_forward_t.1} parent=35 // pred_fallthru
          _
      $region36: #{sequentialmodel_forward_t.1} parent=5 // pred_fallthru
        _
    $region6: #{sequentialmodel_forward_t.1} parent=1 // loop_footer
      %s15 = sadd.s32 1, %s11
    $region7: #{sequentialmodel_forward_t.1} parent=1 // loop_footer_branch
      %10 = sbr.rel target = $region3
    $region8: #{sequentialmodel_forward_t.1} parent=1 // loop_exit
      _
    %1320 = vsyncpa [#allocation3], 1
    %s1321 = scalar_lea.sflag [#allocation3], 1
    %1322 = vsyncpa %s1321, 1

</llo_original>
